<compile_context>
chip_gen: v5e
topology: v5e:2x2
jax: 0.10.0
libtpu: 0.0.40
codegen_flags: <defaults>
</compile_context>

<pallas_src>
import functools

import jax
import jax.numpy as jnp
from jax.experimental import pallas as pl
from jax.experimental.pallas import tpu as pltpu


def _round_up(n, m):
    return (n + m - 1) // m * m


def _roll(v, shift, hw):
    """Circular roll along the flattened-spatial (lane) axis; static, >= 0 shift."""
    shift = shift % hw
    if shift == 0:
        return v
    return pltpu.roll(v, shift, axis=v.ndim - 1)


def _ablock_kernel(x_ref, o_ref, *, W):
    # x_ref / o_ref: (row_tile, H*W).  Rows are fused (batch, channel) spatial
    # planes in natural order; the channel residue (c % 5) selects the LEM
    # shift per row.
    rt, HW = x_ref.shape

    x = x_ref[...].astype(jnp.float32)

    # Global row index of every row in this tile.  Since C % 5 == 0,
    # (b*C + c) % 5 == c % 5, so the residue is recoverable from the fused row
    # index with no relayout.  Using the global index keeps this correct for
    # any row_tile and for a padded edge block.
    row0 = pl.program_id(0) * rt
    res = (row0 + jax.lax.broadcasted_iota(jnp.int32, (rt, HW), 0)) % 5
    res0 = res == 0
    res1 = res == 1
    res2 = res == 2
    res3 = res == 3

    # Column index j = k % W, needed only to fix the row-boundary wrap of the
    # +-1 lane shifts (residues 0 and 1).  Shared by both LEM applications.
    col = jax.lax.broadcasted_iota(jnp.int32, (rt, HW), 1) % W
    first_col = col == 0
    last_col = col == (W - 1)

    def lem(v):
        # Fixed one-hot depthwise conv with circular padding == per-channel
        # circular spatial shift.  Compute all shift variants (XLU rolls are
        # slack under the HBM-bound roofline) and select per row by residue.
        up = _roll(v, W, HW)                                 # r==3: v[i-1, j]
        down = _roll(v, HW - W, HW)                          # r==2: v[i+1, j]
        left = jnp.where(first_col,                          # r==1: v[i, j-1]
                         _roll(v, 1 - W, HW),                # wrap fix at j == 0
                         _roll(v, 1, HW))
        right = jnp.where(last_col,                          # r==0: v[i, j+1]
                          _roll(v, W - 1, HW),               # wrap fix at j == W-1
                          _roll(v, HW - 1, HW))
        out = jnp.where(res3, up, v)                         # r==4: identity
        out = jnp.where(res2, down, out)
        out = jnp.where(res1, left, out)
        out = jnp.where(res0, right, out)
        return out

    f = lem(x)                                               # lem0
    f = f * (0.5 * jnp.tanh(0.5 * f) + 0.5)                  # SiLU (sigmoid via tanh)
    att = 0.5 * jnp.tanh(0.5 * f)                            # sigmoid(f) - 0.5
    fatt = lem(att)                                          # lem1 (same fixed mask)
    o_ref[...] = ((f + x) * fatt).astype(o_ref.dtype)


def _vmem_limit_bytes():
    # Generation-aware VMEM cap: ~75% of physical VMEM (48 MiB on v7x,
    # 96 MiB on v5e/v6e) so compiler scratch / semaphores / spills still fit.
    cap = 64 << 20  # conservative fallback == smallest generation (v7x per-TC)
    try:
        cap = int(pltpu.get_tpu_info().vmem_capacity_bytes)
    except Exception:
        pass
    return int(cap * 3 // 4)


def _pick_row_tile(rows, hw, itemsize, vmem_limit):
    """Row-tile size for the fused (B*C, H*W) layout.

    Budget accounting: double-buffered in + out blocks (4 block-sized buffers)
    plus ~8 live slab-sized temporaries inside the kernel -> ~12 block-sized
    allocations at peak.
    """
    sub = 8 if itemsize >= 4 else 16          # sublane granularity (f32 / bf16)
    lane = _round_up(hw, 128)
    row_bytes = lane * itemsize
    budget = max(vmem_limit // 12, sub * row_bytes)
    max_rows = max(sub, (budget // row_bytes) // sub * sub)
    max_rows = min(max_rows, 1024)            # keep several grid steps for pipelining/megacore
    if rows <= max_rows:
        return rows                           # block dim == full array dim (always legal)
    # Prefer a multiple-of-sublane divisor of rows: no padded edge block.
    for t in range(max_rows, sub - 1, -sub):
        if rows % t == 0:
            return t
    # Fall back to a cdiv grid; Pallas pads the final partial block and drops
    # out-of-bounds writes (rolls/selects never mix rows, so garbage rows stay
    # isolated and are discarded).
    return max_rows


def ablock(x: jax.Array) -> jax.Array:
    """Ablock forward ('spatial' paradigm) for NCHW input."""
    B, C, H, W = x.shape
    assert C % 5 == 0, "LEM requires planes % 5 == 0"
    rows = B * C
    HW = H * W

    # Free, contiguous view: every (b, c) spatial plane becomes one row.
    # If H*W is lane-dense (multiple of 128, as in typical SR feature maps)
    # stores are unmasked full-lane vst; otherwise the full-extent lane block
    # is still legal (block dim == array dim) and merely uses masked stores.
    xf = x.reshape(rows, HW)

    vmem_limit = _vmem_limit_bytes()
    row_tile = _pick_row_tile(rows, HW, xf.dtype.itemsize, vmem_limit)
    grid = (pl.cdiv(rows, row_tile),)

    nelem = x.size
    cost = pl.CostEstimate(
        flops=30 * nelem,                            # rolls/selects + SiLU/attention arithmetic
        transcendentals=2 * nelem,                   # two tanh per element
        bytes_accessed=2 * x.dtype.itemsize * nelem, # one read + one write pass
    )

    out = pl.pallas_call(
        functools.partial(_ablock_kernel, W=W),
        out_shape=jax.ShapeDtypeStruct((rows, HW), x.dtype),
        grid_spec=pltpu.PrefetchScalarGridSpec(
            num_scalar_prefetch=0,
            grid=grid,
            in_specs=[pl.BlockSpec((row_tile, HW), lambda g: (g, 0))],
            out_specs=pl.BlockSpec((row_tile, HW), lambda g: (g, 0)),
        ),
        compiler_params=pltpu.CompilerParams(
            dimension_semantics=("parallel",),
            vmem_limit_bytes=vmem_limit,
        ),
        cost_estimate=cost,
    )(xf)

    return out.reshape(B, C, H, W)


# ---------------- pure-JAX reference (for correctness check) ----------------
def _lem_ref(x):
    C = x.shape[1]
    r = (jnp.arange(C) % 5)[None, :, None, None]
    up = jnp.roll(x, 1, axis=2)
    down = jnp.roll(x, -1, axis=2)
    left = jnp.roll(x, 1, axis=3)
    right = jnp.roll(x, -1, axis=3)
    out = jnp.where(r == 3, up, x)
    out = jnp.where(r == 2, down, out)
    out = jnp.where(r == 1, left, out)
    out = jnp.where(r == 0, right, out)
    return out


def _ablock_ref(x):
    f = _lem_ref(x)
    f = f * jax.nn.sigmoid(f)
    fatt = _lem_ref(jax.nn.sigmoid(f) - 0.5)
    return (f + x) * fatt


if __name__ == "__main__":
    key = jax.random.PRNGKey(0)
    B, C, H, W = 2, 20, 16, 16   # channels divisible by 5; H*W = 256 (lane dense)
    x = jax.random.normal(key, (B, C, H, W), dtype=jnp.float32)

    out = jax.block_until_ready(ablock(x))

    ref = _ablock_ref(x)
    assert out.shape == ref.shape and out.dtype == ref.dtype
    err = float(jnp.max(jnp.abs(out - ref)))
    assert jnp.allclose(out, ref, atol=1e-5, rtol=1e-5), f"max abs err = {err}"

    print("KERNEL_OK")
</pallas_src>

<mosaic_0001>
module attributes {stable_mosaic.version = 11 : i64} {
  func.func @_ablock_kernel(%arg0: i32, %arg1: memref<40x256xf32, #tpu.memory_space<vmem>>, %arg2: memref<40x256xf32, #tpu.memory_space<vmem>>) attributes {dimension_semantics = [#tpu.dimension_semantics<parallel>], iteration_bounds = array<i64: 1>, scalar_prefetch = 0 : i64, scratch_operands = 0 : i64, tpu.core_type = #tpu.core_type<tc>, window_params = [{transform_indices = @transform_0, window_bounds = array<i64: 40, 256>}, {transform_indices = @transform_1, window_bounds = array<i64: 40, 256>}]} {
    %c0 = arith.constant 0 : index
    %c0_0 = arith.constant 0 : index
    %0 = vector.load %arg1[%c0, %c0_0] : memref<40x256xf32, #tpu.memory_space<vmem>>, vector<40x256xf32>
    %c40_i32 = arith.constant 40 : i32
    %1 = arith.muli %arg0, %c40_i32 : i32
    %2 = tpu.iota {dimensions = array<i32: 0>} : vector<40x256xi32>
    %3 = vector.broadcast %1 : i32 to vector<40x256xi32>
    %4 = arith.addi %3, %2 : vector<40x256xi32>
    %c5_i32 = arith.constant 5 : i32
    %c0_i32 = arith.constant 0 : i32
    %5 = arith.cmpi eq, %c5_i32, %c0_i32 : i32
    %c1_i32 = arith.constant 1 : i32
    %6 = arith.select %5, %c1_i32, %c5_i32 : i32
    %7 = vector.broadcast %6 : i32 to vector<40x256xi32>
    %8 = arith.remsi %4, %7 : vector<40x256xi32>
    %c0_i32_1 = arith.constant 0 : i32
    %9 = vector.broadcast %c0_i32_1 : i32 to vector<40x256xi32>
    %10 = arith.cmpi ne, %8, %9 : vector<40x256xi32>
    %c0_i32_2 = arith.constant 0 : i32
    %11 = vector.broadcast %c0_i32_2 : i32 to vector<40x256xi32>
    %12 = arith.cmpi slt, %8, %11 : vector<40x256xi32>
    %c0_i32_3 = arith.constant 0 : i32
    %13 = arith.cmpi slt, %6, %c0_i32_3 : i32
    %14 = vector.broadcast %13 : i1 to vector<40x256xi1>
    %15 = vector.broadcast %14 : vector<40x256xi1> to vector<40x256xi1>
    %16 = arith.xori %12, %15 : vector<40x256xi1>
    %17 = arith.andi %16, %10 : vector<40x256xi1>
    %18 = vector.broadcast %6 : i32 to vector<40x256xi32>
    %19 = arith.addi %8, %18 : vector<40x256xi32>
    %20 = arith.select %17, %19, %8 : vector<40x256xi1>, vector<40x256xi32>
    %c0_i32_4 = arith.constant 0 : i32
    %21 = vector.broadcast %c0_i32_4 : i32 to vector<40x256xi32>
    %22 = arith.cmpi eq, %20, %21 : vector<40x256xi32>
    %c1_i32_5 = arith.constant 1 : i32
    %23 = vector.broadcast %c1_i32_5 : i32 to vector<40x256xi32>
    %24 = arith.cmpi eq, %20, %23 : vector<40x256xi32>
    %c2_i32 = arith.constant 2 : i32
    %25 = vector.broadcast %c2_i32 : i32 to vector<40x256xi32>
    %26 = arith.cmpi eq, %20, %25 : vector<40x256xi32>
    %c3_i32 = arith.constant 3 : i32
    %27 = vector.broadcast %c3_i32 : i32 to vector<40x256xi32>
    %28 = arith.cmpi eq, %20, %27 : vector<40x256xi32>
    %29 = tpu.iota {dimensions = array<i32: 1>} : vector<40x256xi32>
    %c16_i32 = arith.constant 16 : i32
    %c0_i32_6 = arith.constant 0 : i32
    %30 = arith.cmpi eq, %c16_i32, %c0_i32_6 : i32
    %c1_i32_7 = arith.constant 1 : i32
    %31 = arith.select %30, %c1_i32_7, %c16_i32 : i32
    %32 = vector.broadcast %31 : i32 to vector<40x256xi32>
    %33 = arith.remsi %29, %32 : vector<40x256xi32>
    %c0_i32_8 = arith.constant 0 : i32
    %34 = vector.broadcast %c0_i32_8 : i32 to vector<40x256xi32>
    %35 = arith.cmpi ne, %33, %34 : vector<40x256xi32>
    %c0_i32_9 = arith.constant 0 : i32
    %36 = vector.broadcast %c0_i32_9 : i32 to vector<40x256xi32>
    %37 = arith.cmpi slt, %33, %36 : vector<40x256xi32>
    %c0_i32_10 = arith.constant 0 : i32
    %38 = arith.cmpi slt, %31, %c0_i32_10 : i32
    %39 = vector.broadcast %38 : i1 to vector<40x256xi1>
    %40 = vector.broadcast %39 : vector<40x256xi1> to vector<40x256xi1>
    %41 = arith.xori %37, %40 : vector<40x256xi1>
    %42 = arith.andi %41, %35 : vector<40x256xi1>
    %43 = vector.broadcast %31 : i32 to vector<40x256xi32>
    %44 = arith.addi %33, %43 : vector<40x256xi32>
    %45 = arith.select %42, %44, %33 : vector<40x256xi1>, vector<40x256xi32>
    %c0_i32_11 = arith.constant 0 : i32
    %46 = vector.broadcast %c0_i32_11 : i32 to vector<40x256xi32>
    %47 = arith.cmpi eq, %45, %46 : vector<40x256xi32>
    %c15_i32 = arith.constant 15 : i32
    %48 = vector.broadcast %c15_i32 : i32 to vector<40x256xi32>
    %49 = arith.cmpi eq, %45, %48 : vector<40x256xi32>
    %c16_i32_12 = arith.constant 16 : i32
    %50 = tpu.dynamic_rotate %0 by %c16_i32_12 dim 1 : vector<40x256xf32>, i32 -> vector<40x256xf32>
    %c240_i32 = arith.constant 240 : i32
    %51 = tpu.dynamic_rotate %0 by %c240_i32 dim 1 : vector<40x256xf32>, i32 -> vector<40x256xf32>
    %c241_i32 = arith.constant 241 : i32
    %52 = tpu.dynamic_rotate %0 by %c241_i32 dim 1 : vector<40x256xf32>, i32 -> vector<40x256xf32>
    %c1_i32_13 = arith.constant 1 : i32
    %53 = tpu.dynamic_rotate %0 by %c1_i32_13 dim 1 : vector<40x256xf32>, i32 -> vector<40x256xf32>
    %54 = arith.select %47, %52, %53 : vector<40x256xi1>, vector<40x256xf32>
    %c15_i32_14 = arith.constant 15 : i32
    %55 = tpu.dynamic_rotate %0 by %c15_i32_14 dim 1 : vector<40x256xf32>, i32 -> vector<40x256xf32>
    %c255_i32 = arith.constant 255 : i32
    %56 = tpu.dynamic_rotate %0 by %c255_i32 dim 1 : vector<40x256xf32>, i32 -> vector<40x256xf32>
    %57 = arith.select %49, %55, %56 : vector<40x256xi1>, vector<40x256xf32>
    %58 = arith.select %28, %50, %0 : vector<40x256xi1>, vector<40x256xf32>
    %59 = arith.select %26, %51, %58 : vector<40x256xi1>, vector<40x256xf32>
    %60 = arith.select %24, %54, %59 : vector<40x256xi1>, vector<40x256xf32>
    %61 = arith.select %22, %57, %60 : vector<40x256xi1>, vector<40x256xf32>
    %cst = arith.constant 5.000000e-01 : f32
    %62 = vector.broadcast %cst : f32 to vector<40x256xf32>
    %63 = arith.mulf %62, %61 : vector<40x256xf32>
    %64 = math.tanh %63 : vector<40x256xf32>
    %cst_15 = arith.constant 5.000000e-01 : f32
    %65 = vector.broadcast %cst_15 : f32 to vector<40x256xf32>
    %66 = arith.mulf %65, %64 : vector<40x256xf32>
    %cst_16 = arith.constant 5.000000e-01 : f32
    %67 = vector.broadcast %cst_16 : f32 to vector<40x256xf32>
    %68 = arith.addf %66, %67 : vector<40x256xf32>
    %69 = arith.mulf %61, %68 : vector<40x256xf32>
    %cst_17 = arith.constant 5.000000e-01 : f32
    %70 = vector.broadcast %cst_17 : f32 to vector<40x256xf32>
    %71 = arith.mulf %70, %69 : vector<40x256xf32>
    %72 = math.tanh %71 : vector<40x256xf32>
    %cst_18 = arith.constant 5.000000e-01 : f32
    %73 = vector.broadcast %cst_18 : f32 to vector<40x256xf32>
    %74 = arith.mulf %73, %72 : vector<40x256xf32>
    %c16_i32_19 = arith.constant 16 : i32
    %75 = tpu.dynamic_rotate %74 by %c16_i32_19 dim 1 : vector<40x256xf32>, i32 -> vector<40x256xf32>
    %c240_i32_20 = arith.constant 240 : i32
    %76 = tpu.dynamic_rotate %74 by %c240_i32_20 dim 1 : vector<40x256xf32>, i32 -> vector<40x256xf32>
    %c241_i32_21 = arith.constant 241 : i32
    %77 = tpu.dynamic_rotate %74 by %c241_i32_21 dim 1 : vector<40x256xf32>, i32 -> vector<40x256xf32>
    %c1_i32_22 = arith.constant 1 : i32
    %78 = tpu.dynamic_rotate %74 by %c1_i32_22 dim 1 : vector<40x256xf32>, i32 -> vector<40x256xf32>
    %79 = arith.select %47, %77, %78 : vector<40x256xi1>, vector<40x256xf32>
    %c15_i32_23 = arith.constant 15 : i32
    %80 = tpu.dynamic_rotate %74 by %c15_i32_23 dim 1 : vector<40x256xf32>, i32 -> vector<40x256xf32>
    %c255_i32_24 = arith.constant 255 : i32
    %81 = tpu.dynamic_rotate %74 by %c255_i32_24 dim 1 : vector<40x256xf32>, i32 -> vector<40x256xf32>
    %82 = arith.select %49, %80, %81 : vector<40x256xi1>, vector<40x256xf32>
    %83 = arith.select %28, %75, %74 : vector<40x256xi1>, vector<40x256xf32>
    %84 = arith.select %26, %76, %83 : vector<40x256xi1>, vector<40x256xf32>
    %85 = arith.select %24, %79, %84 : vector<40x256xi1>, vector<40x256xf32>
    %86 = arith.select %22, %82, %85 : vector<40x256xi1>, vector<40x256xf32>
    %87 = arith.addf %69, %0 : vector<40x256xf32>
    %88 = arith.mulf %87, %86 : vector<40x256xf32>
    %c0_25 = arith.constant 0 : index
    %c0_26 = arith.constant 0 : index
    %89 = vector.load %arg2[%c0_25, %c0_26] : memref<40x256xf32, #tpu.memory_space<vmem>>, vector<40x256xf32>
    tpu.vector_store %arg2[%c0_25, %c0_26], %88 {strides = array<i32>} : memref<40x256xf32, #tpu.memory_space<vmem>>, vector<40x256xf32>,
    return
  }
  func.func @transform_0(%arg0: i32) -> (i32, i32) {
    %c0_i32 = arith.constant 0 : i32
    %c0_i32_0 = arith.constant 0 : i32
    return %arg0, %c0_i32 : i32, i32
  }
  func.func @transform_1(%arg0: i32) -> (i32, i32) {
    %c0_i32 = arith.constant 0 : i32
    %c0_i32_0 = arith.constant 0 : i32
    return %arg0, %c0_i32 : i32, i32
  }
}

</mosaic_0001>

<llo_original>
// kernel: tpu_custom_call.1
$region0: #{tpu_custom_call.1}
  #allocation0 [shape = 'u32[]', space=smem, size = 0x4, offset = 0x4, fixed_abs, tag = 'smem constant byte address 0x4 - core index']
  #allocation1 [shape = 'u32[72,128]{1,0:T(1,128)}', space=vmem, size = 0x9000, scoped, tag = 'internal scratch']
  %s0 = inlined_call_operand.hbm [shape: f32[40,256], index: 0, kind: input, shape index: {}]
  %s1 = inlined_call_operand.hbm [shape: f32[40,256], index: 1, kind: output, shape index: {}]
  %s2 = sld [smem:[#allocation0]]
  $region18: #{tpu_custom_call.1} parent=0
    _
  %s4 = ssub.s32 1, %s2
  %s5 = scalar_select 0, %s4, %s2
  $region1: #{tpu_custom_call.1} parent=0
    #allocation2 [shape = 'u8[40960]{0}', space=vmem, size = 0xa000, scoped, tag = 'input window, operand 0, single buffered']
    #allocation3 [shape = 's32[1]{0}', space=sflag, size = 0x4, scoped, tag = 'scoped memory for tpu_custom_call.1']
    #allocation4 [shape = 's32[1]{0}', space=sflag, size = 0x4, scoped, tag = 'scoped memory for tpu_custom_call.1']
    #allocation5 [shape = 'u8[40960]{0}', space=vmem, size = 0xa000, scoped, tag = 'output window, operand 0, single buffered']
    %6 = vsyncpa [#allocation3], 0
    %7 = vsyncpa [#allocation4], 0
    // Predicated region
    $region2: #{tpu_custom_call.1} parent=1 // pred_check
      _
    $region3: #{tpu_custom_call.1} parent=1 // pred_check_branch
      %9 = sbr.rel (0) target = $region5
    $region4: #{tpu_custom_call.1} parent=1 // pred_region
      %11 = vsyncadd [#allocation3], 0
      %s12 = sshll.u32 %s0, 4
      %s13 = int_to_ptr.hbm [resolvable:$true] %s12
      %s14 = sshll.u32 [#allocation2], 4
      %s15 = int_to_ptr.vmem [resolvable:$true] %s14
      %20 = dma.hbm_to_vmem [thread:$0]  %s13, 1280, %s15, [#allocation3], 256, 256, 16
    $region5: #{tpu_custom_call.1} parent=1 // pred_fallthru
      _
    // Predicated region
    $region6: #{tpu_custom_call.1} parent=1 // pred_check
      _
    $region7: #{tpu_custom_call.1} parent=1 // pred_check_branch
      %22 = sbr.rel (0) target = $region9
    $region8: #{tpu_custom_call.1} parent=1 // pred_region
      %24 = dma.done [#allocation3], 1280
    $region9: #{tpu_custom_call.1} parent=1 // pred_fallthru
      _
    %v25 = vld [vmem:[#allocation2] sm:$0xff]
    %v26 = vld [vmem:[#allocation2 + $0x8] sm:$0xff]
    %v27 = vld [vmem:[#allocation2 + $0x10] sm:$0xff]
    %v28 = vld [vmem:[#allocation2 + $0x18] sm:$0xff]
    %v29 = vld [vmem:[#allocation2 + $0x20] sm:$0xff]
    %v30 = vld [vmem:[#allocation2 + $0x28] sm:$0xff]
    %v31 = vld [vmem:[#allocation2 + $0x30] sm:$0xff]
    %v32 = vld [vmem:[#allocation2 + $0x38] sm:$0xff]
    %v33 = vld [vmem:[#allocation2 + $0x40] sm:$0xff]
    %v34 = vld [vmem:[#allocation2 + $0x48] sm:$0xff]
    %s35 = smul.u32 0, 40
    %v36 = vlaneseq
    %v37 = vshrl.u32 %v36, 7
    %v38 = vadd.s32 %v37, 8
    %v39 = vadd.s32 %v37, 16
    %v40 = vadd.s32 %v37, 24
    %v41 = vadd.s32 %v37, 32
    %v42 = vstv %s35
    %v43 = vadd.s32 %v42, %v37
    %v44 = vadd.s32 %v42, %v38
    %v45 = vadd.s32 %v42, %v39
    %v46 = vadd.s32 %v42, %v40
    %v47 = vadd.s32 %v42, %v41
    %vm48 = vcmp.lt.s32.totalorder %v43, 0
    %v49 = vsub.s32 0, %v43
    %v50 = vsel %vm48, %v49, %v43
    %v51 = vand.u32 %v50, 65535
    %v52 = vshrl.u32 %v50, 16
    %v54 = vmul.u32 %v51, 52429
    %v55 = vmul.u32 %v51, 52428
    %v56 = vmul.u32 %v52, 52429
    %v57 = vmul.u32 %v52, 52428
    %v58 = vshll.u32 %v55, 16
    %v59 = vshrl.u32 %v55, 16
    %v60 = vshll.u32 %v56, 16
    %v61 = vshrl.u32 %v56, 16
    %vm62 = vc.u32 %v54, %v58
    %v63 = vsel %vm62, 1, 0
    %v64 = vadd.s32 %v54, %v58
    %v65 = vadd.s32 %v57, %v63
    %vm66 = vc.u32 %v64, %v60
    %v67 = vsel %vm66, 1, 0
    %v68 = vadd.s32 %v64, %v60
    %v69 = vadd.s32 %v65, %v67
    %v70 = vadd.s32 %v69, %v59
    %v71 = vadd.s32 %v70, %v61
    %v72 = vshrl.u32 %v71, 2
    %v73 = vmul.u32 %v72, 5
    %v74 = vsub.s32 %v50, %v73
    %v75 = vsub.s32 0, %v74
    %v76 = vsel %vm48, %v75, %v74
    %vm77 = vcmp.lt.s32.totalorder %v44, 0
    %v78 = vsub.s32 0, %v44
    %v79 = vsel %vm77, %v78, %v44
    %v80 = vand.u32 %v79, 65535
    %v81 = vshrl.u32 %v79, 16
    %v83 = vmul.u32 %v80, 52429
    %v84 = vmul.u32 %v80, 52428
    %v85 = vmul.u32 %v81, 52429
    %v86 = vmul.u32 %v81, 52428
    %v87 = vshll.u32 %v84, 16
    %v88 = vshrl.u32 %v84, 16
    %v89 = vshll.u32 %v85, 16
    %v90 = vshrl.u32 %v85, 16
    %vm91 = vc.u32 %v83, %v87
    %v92 = vsel %vm91, 1, 0
    %v93 = vadd.s32 %v83, %v87
    %v94 = vadd.s32 %v86, %v92
    %vm95 = vc.u32 %v93, %v89
    %v96 = vsel %vm95, 1, 0
    %v97 = vadd.s32 %v93, %v89
    %v98 = vadd.s32 %v94, %v96
    %v99 = vadd.s32 %v98, %v88
    %v100 = vadd.s32 %v99, %v90
    %v101 = vshrl.u32 %v100, 2
    %v102 = vmul.u32 %v101, 5
    %v103 = vsub.s32 %v79, %v102
    %v104 = vsub.s32 0, %v103
    %v105 = vsel %vm77, %v104, %v103
    %vm106 = vcmp.lt.s32.totalorder %v45, 0
    %v107 = vsub.s32 0, %v45
    %v108 = vsel %vm106, %v107, %v45
    %v109 = vand.u32 %v108, 65535
    %v110 = vshrl.u32 %v108, 16
    %v112 = vmul.u32 %v109, 52429
    %v113 = vmul.u32 %v109, 52428
    %v114 = vmul.u32 %v110, 52429
    %v115 = vmul.u32 %v110, 52428
    %v116 = vshll.u32 %v113, 16
    %v117 = vshrl.u32 %v113, 16
    %v118 = vshll.u32 %v114, 16
    %v119 = vshrl.u32 %v114, 16
    %vm120 = vc.u32 %v112, %v116
    %v121 = vsel %vm120, 1, 0
    %v122 = vadd.s32 %v112, %v116
    %v123 = vadd.s32 %v115, %v121
    %vm124 = vc.u32 %v122, %v118
    %v125 = vsel %vm124, 1, 0
    %v126 = vadd.s32 %v122, %v118
    %v127 = vadd.s32 %v123, %v125
    %v128 = vadd.s32 %v127, %v117
    %v129 = vadd.s32 %v128, %v119
    %v130 = vshrl.u32 %v129, 2
    %v131 = vmul.u32 %v130, 5
    %v132 = vsub.s32 %v108, %v131
    %v133 = vsub.s32 0, %v132
    %v134 = vsel %vm106, %v133, %v132
    %vm135 = vcmp.lt.s32.totalorder %v46, 0
    %v136 = vsub.s32 0, %v46
    %v137 = vsel %vm135, %v136, %v46
    %v138 = vand.u32 %v137, 65535
    %v139 = vshrl.u32 %v137, 16
    %v141 = vmul.u32 %v138, 52429
    %v142 = vmul.u32 %v138, 52428
    %v143 = vmul.u32 %v139, 52429
    %v144 = vmul.u32 %v139, 52428
    %v145 = vshll.u32 %v142, 16
    %v146 = vshrl.u32 %v142, 16
    %v147 = vshll.u32 %v143, 16
    %v148 = vshrl.u32 %v143, 16
    %vm149 = vc.u32 %v141, %v145
    %v150 = vsel %vm149, 1, 0
    %v151 = vadd.s32 %v141, %v145
    %v152 = vadd.s32 %v144, %v150
    %vm153 = vc.u32 %v151, %v147
    %v154 = vsel %vm153, 1, 0
    %v155 = vadd.s32 %v151, %v147
    %v156 = vadd.s32 %v152, %v154
    %v157 = vadd.s32 %v156, %v146
    %v158 = vadd.s32 %v157, %v148
    %v159 = vshrl.u32 %v158, 2
    %v160 = vmul.u32 %v159, 5
    %v161 = vsub.s32 %v137, %v160
    %v162 = vsub.s32 0, %v161
    %v163 = vsel %vm135, %v162, %v161
    %vm164 = vcmp.lt.s32.totalorder %v47, 0
    %v165 = vsub.s32 0, %v47
    %v166 = vsel %vm164, %v165, %v47
    %v167 = vand.u32 %v166, 65535
    %v168 = vshrl.u32 %v166, 16
    %v170 = vmul.u32 %v167, 52429
    %v171 = vmul.u32 %v167, 52428
    %v172 = vmul.u32 %v168, 52429
    %v173 = vmul.u32 %v168, 52428
    %v174 = vshll.u32 %v171, 16
    %v175 = vshrl.u32 %v171, 16
    %v176 = vshll.u32 %v172, 16
    %v177 = vshrl.u32 %v172, 16
    %vm178 = vc.u32 %v170, %v174
    %v179 = vsel %vm178, 1, 0
    %v180 = vadd.s32 %v170, %v174
    %v181 = vadd.s32 %v173, %v179
    %vm182 = vc.u32 %v180, %v176
    %v183 = vsel %vm182, 1, 0
    %v184 = vadd.s32 %v180, %v176
    %v185 = vadd.s32 %v181, %v183
    %v186 = vadd.s32 %v185, %v175
    %v187 = vadd.s32 %v186, %v177
    %v188 = vshrl.u32 %v187, 2
    %v189 = vmul.u32 %v188, 5
    %v190 = vsub.s32 %v166, %v189
    %v191 = vsub.s32 0, %v190
    %v192 = vsel %vm164, %v191, %v190
    %vm193 = vcmp.ne.s32.totalorder %v76, 0
    %vm194 = vcmp.ne.s32.totalorder %v105, 0
    %vm195 = vcmp.ne.s32.totalorder %v134, 0
    %vm196 = vcmp.ne.s32.totalorder %v163, 0
    %vm197 = vcmp.ne.s32.totalorder %v192, 0
    %vm198 = vcmp.lt.s32.totalorder %v76, 0
    %vm199 = vcmp.lt.s32.totalorder %v105, 0
    %vm200 = vcmp.lt.s32.totalorder %v134, 0
    %vm201 = vcmp.lt.s32.totalorder %v163, 0
    %vm202 = vcmp.lt.s32.totalorder %v192, 0
    %vm203 = vmand %vm198, %vm193
    %vm204 = vmand %vm199, %vm194
    %vm205 = vmand %vm200, %vm195
    %vm206 = vmand %vm201, %vm196
    %vm207 = vmand %vm202, %vm197
    %v208 = vadd.s32 %v76, 5
    %v209 = vadd.s32 %v105, 5
    %v210 = vadd.s32 %v134, 5
    %v211 = vadd.s32 %v163, 5
    %v212 = vadd.s32 %v192, 5
    %v213 = vsel %vm203, %v208, %v76
    %v214 = vsel %vm204, %v209, %v105
    %v215 = vsel %vm205, %v210, %v134
    %v216 = vsel %vm206, %v211, %v163
    %v217 = vsel %vm207, %v212, %v192
    %vm218 = vcmp.eq.s32.totalorder %v213, 0
    %vm219 = vcmp.eq.s32.totalorder %v214, 0
    %vm220 = vcmp.eq.s32.totalorder %v215, 0
    %vm221 = vcmp.eq.s32.totalorder %v216, 0
    %vm222 = vcmp.eq.s32.totalorder %v217, 0
    %vm223 = vcmp.eq.s32.totalorder %v213, 1
    %vm224 = vcmp.eq.s32.totalorder %v214, 1
    %vm225 = vcmp.eq.s32.totalorder %v215, 1
    %vm226 = vcmp.eq.s32.totalorder %v216, 1
    %vm227 = vcmp.eq.s32.totalorder %v217, 1
    %vm228 = vcmp.eq.s32.totalorder %v213, 2
    %vm229 = vcmp.eq.s32.totalorder %v214, 2
    %vm230 = vcmp.eq.s32.totalorder %v215, 2
    %vm231 = vcmp.eq.s32.totalorder %v216, 2
    %vm232 = vcmp.eq.s32.totalorder %v217, 2
    %vm233 = vcmp.eq.s32.totalorder %v213, 3
    %vm234 = vcmp.eq.s32.totalorder %v214, 3
    %vm235 = vcmp.eq.s32.totalorder %v215, 3
    %vm236 = vcmp.eq.s32.totalorder %v216, 3
    %vm237 = vcmp.eq.s32.totalorder %v217, 3
    %v238 = vlaneseq
    %v239 = vand.u32 %v238, 127
    %v240 = vadd.s32 %v239, 128
    %vm241 = vcmp.lt.s32.totalorder %v239, 0
    %v242 = vsub.s32 0, %v239
    %v243 = vsel %vm241, %v242, %v239
    %v244 = vshrl.u32 %v243, 4
    %v245 = vand.u32 %v243, 15
    %v246 = vsub.s32 0, %v245
    %v247 = vsel %vm241, %v246, %v245
    %vm248 = vcmp.lt.s32.totalorder %v240, 0
    %v249 = vsub.s32 0, %v240
    %v250 = vsel %vm248, %v249, %v240
    %v251 = vshrl.u32 %v250, 4
    %v252 = vand.u32 %v250, 15
    %v253 = vsub.s32 0, %v252
    %v254 = vsel %vm248, %v253, %v252
    %vm255 = vcmp.ne.s32.totalorder %v247, 0
    %vm256 = vcmp.ne.s32.totalorder %v254, 0
    %vm257 = vcmp.lt.s32.totalorder %v247, 0
    %vm258 = vcmp.lt.s32.totalorder %v254, 0
    %vm259 = vmand %vm257, %vm255
    %vm260 = vmand %vm258, %vm256
    %v261 = vadd.s32 %v247, 16
    %v262 = vadd.s32 %v254, 16
    %v263 = vsel %vm259, %v261, %v247
    %v264 = vsel %vm260, %v262, %v254
    %vm265 = vcmp.eq.s32.totalorder %v263, 0
    %vm266 = vcmp.eq.s32.totalorder %v264, 0
    %vm267 = vcmp.eq.s32.totalorder %v263, 15
    %vm268 = vcmp.eq.s32.totalorder %v264, 15
    %269 = vrot.lane.b32.xlu0 %v25, 16
    %v270 = vpop.permute.xlu0 %269
    %271 = vrot.lane.b32.xlu0 %v27, 16
    %v272 = vpop.permute.xlu0 %271
    %273 = vrot.lane.b32.xlu0 %v29, 16
    %v274 = vpop.permute.xlu0 %273
    %275 = vrot.lane.b32.xlu0 %v31, 16
    %v276 = vpop.permute.xlu0 %275
    %277 = vrot.lane.b32.xlu0 %v33, 16
    %v278 = vpop.permute.xlu0 %277
    %279 = vrot.lane.b32.xlu0 %v26, 16
    %v280 = vpop.permute.xlu0 %279
    %281 = vrot.lane.b32.xlu0 %v28, 16
    %v282 = vpop.permute.xlu0 %281
    %283 = vrot.lane.b32.xlu0 %v30, 16
    %v284 = vpop.permute.xlu0 %283
    %285 = vrot.lane.b32.xlu0 %v32, 16
    %v286 = vpop.permute.xlu0 %285
    %287 = vrot.lane.b32.xlu0 %v34, 16
    %v288 = vpop.permute.xlu0 %287
    %vm289 = vcmp.lt.s32.totalorder %v239, 16
    %v290 = vsel %vm289, %v270, %v280
    %v291 = vsel %vm289, %v272, %v282
    %v292 = vsel %vm289, %v274, %v284
    %v293 = vsel %vm289, %v276, %v286
    %v294 = vsel %vm289, %v278, %v288
    %v295 = vsel %vm289, %v280, %v270
    %v296 = vsel %vm289, %v282, %v272
    %v297 = vsel %vm289, %v284, %v274
    %v298 = vsel %vm289, %v286, %v276
    %v299 = vsel %vm289, %v288, %v278
    %300 = vrot.lane.b32.xlu0 %v25, 112
    %v301 = vpop.permute.xlu0 %300
    %302 = vrot.lane.b32.xlu0 %v27, 112
    %v303 = vpop.permute.xlu0 %302
    %304 = vrot.lane.b32.xlu0 %v29, 112
    %v305 = vpop.permute.xlu0 %304
    %306 = vrot.lane.b32.xlu0 %v31, 112
    %v307 = vpop.permute.xlu0 %306
    %308 = vrot.lane.b32.xlu0 %v33, 112
    %v309 = vpop.permute.xlu0 %308
    %310 = vrot.lane.b32.xlu0 %v26, 112
    %v311 = vpop.permute.xlu0 %310
    %312 = vrot.lane.b32.xlu0 %v28, 112
    %v313 = vpop.permute.xlu0 %312
    %314 = vrot.lane.b32.xlu0 %v30, 112
    %v315 = vpop.permute.xlu0 %314
    %316 = vrot.lane.b32.xlu0 %v32, 112
    %v317 = vpop.permute.xlu0 %316
    %318 = vrot.lane.b32.xlu0 %v34, 112
    %v319 = vpop.permute.xlu0 %318
    %vm320 = vcmp.lt.s32.totalorder %v239, 112
    %v321 = vsel %vm320, %v301, %v311
    %v322 = vsel %vm320, %v303, %v313
    %v323 = vsel %vm320, %v305, %v315
    %v324 = vsel %vm320, %v307, %v317
    %v325 = vsel %vm320, %v309, %v319
    %v326 = vsel %vm320, %v311, %v301
    %v327 = vsel %vm320, %v313, %v303
    %v328 = vsel %vm320, %v315, %v305
    %v329 = vsel %vm320, %v317, %v307
    %v330 = vsel %vm320, %v319, %v309
    %331 = vrot.lane.b32.xlu0 %v25, 113
    %v332 = vpop.permute.xlu0 %331
    %333 = vrot.lane.b32.xlu0 %v27, 113
    %v334 = vpop.permute.xlu0 %333
    %335 = vrot.lane.b32.xlu0 %v29, 113
    %v336 = vpop.permute.xlu0 %335
    %337 = vrot.lane.b32.xlu0 %v31, 113
    %v338 = vpop.permute.xlu0 %337
    %339 = vrot.lane.b32.xlu0 %v33, 113
    %v340 = vpop.permute.xlu0 %339
    %341 = vrot.lane.b32.xlu0 %v26, 113
    %v342 = vpop.permute.xlu0 %341
    %343 = vrot.lane.b32.xlu0 %v28, 113
    %v344 = vpop.permute.xlu0 %343
    %345 = vrot.lane.b32.xlu0 %v30, 113
    %v346 = vpop.permute.xlu0 %345
    %347 = vrot.lane.b32.xlu0 %v32, 113
    %v348 = vpop.permute.xlu0 %347
    %349 = vrot.lane.b32.xlu0 %v34, 113
    %v350 = vpop.permute.xlu0 %349
    %vm351 = vcmp.lt.s32.totalorder %v239, 113
    %v352 = vsel %vm351, %v332, %v342
    %v353 = vsel %vm351, %v334, %v344
    %v354 = vsel %vm351, %v336, %v346
    %v355 = vsel %vm351, %v338, %v348
    %v356 = vsel %vm351, %v340, %v350
    %v357 = vsel %vm351, %v342, %v332
    %v358 = vsel %vm351, %v344, %v334
    %v359 = vsel %vm351, %v346, %v336
    %v360 = vsel %vm351, %v348, %v338
    %v361 = vsel %vm351, %v350, %v340
    %362 = vrot.lane.b32.xlu0 %v25, 1
    %v363 = vpop.permute.xlu0 %362
    %364 = vrot.lane.b32.xlu0 %v27, 1
    %v365 = vpop.permute.xlu0 %364
    %366 = vrot.lane.b32.xlu0 %v29, 1
    %v367 = vpop.permute.xlu0 %366
    %368 = vrot.lane.b32.xlu0 %v31, 1
    %v369 = vpop.permute.xlu0 %368
    %370 = vrot.lane.b32.xlu0 %v33, 1
    %v371 = vpop.permute.xlu0 %370
    %372 = vrot.lane.b32.xlu0 %v26, 1
    %v373 = vpop.permute.xlu0 %372
    %374 = vrot.lane.b32.xlu0 %v28, 1
    %v375 = vpop.permute.xlu0 %374
    %376 = vrot.lane.b32.xlu0 %v30, 1
    %v377 = vpop.permute.xlu0 %376
    %378 = vrot.lane.b32.xlu0 %v32, 1
    %v379 = vpop.permute.xlu0 %378
    %380 = vrot.lane.b32.xlu0 %v34, 1
    %v381 = vpop.permute.xlu0 %380
    %vm382 = vcmp.lt.s32.totalorder %v239, 1
    %v383 = vsel %vm382, %v363, %v373
    %v384 = vsel %vm382, %v365, %v375
    %v385 = vsel %vm382, %v367, %v377
    %v386 = vsel %vm382, %v369, %v379
    %v387 = vsel %vm382, %v371, %v381
    %v388 = vsel %vm382, %v373, %v363
    %v389 = vsel %vm382, %v375, %v365
    %v390 = vsel %vm382, %v377, %v367
    %v391 = vsel %vm382, %v379, %v369
    %v392 = vsel %vm382, %v381, %v371
    %v393 = vsel %vm265, %v352, %v388
    %v394 = vsel %vm266, %v357, %v383
    %v395 = vsel %vm265, %v353, %v389
    %v396 = vsel %vm266, %v358, %v384
    %v397 = vsel %vm265, %v354, %v390
    %v398 = vsel %vm266, %v359, %v385
    %v399 = vsel %vm265, %v355, %v391
    %v400 = vsel %vm266, %v360, %v386
    %v401 = vsel %vm265, %v356, %v392
    %v402 = vsel %vm266, %v361, %v387
    %403 = vrot.lane.b32.xlu0 %v25, 15
    %v404 = vpop.permute.xlu0 %403
    %405 = vrot.lane.b32.xlu0 %v27, 15
    %v406 = vpop.permute.xlu0 %405
    %407 = vrot.lane.b32.xlu0 %v29, 15
    %v408 = vpop.permute.xlu0 %407
    %409 = vrot.lane.b32.xlu0 %v31, 15
    %v410 = vpop.permute.xlu0 %409
    %411 = vrot.lane.b32.xlu0 %v33, 15
    %v412 = vpop.permute.xlu0 %411
    %413 = vrot.lane.b32.xlu0 %v26, 15
    %v414 = vpop.permute.xlu0 %413
    %415 = vrot.lane.b32.xlu0 %v28, 15
    %v416 = vpop.permute.xlu0 %415
    %417 = vrot.lane.b32.xlu0 %v30, 15
    %v418 = vpop.permute.xlu0 %417
    %419 = vrot.lane.b32.xlu0 %v32, 15
    %v420 = vpop.permute.xlu0 %419
    %421 = vrot.lane.b32.xlu0 %v34, 15
    %v422 = vpop.permute.xlu0 %421
    %vm423 = vcmp.lt.s32.totalorder %v239, 15
    %v424 = vsel %vm423, %v404, %v414
    %v425 = vsel %vm423, %v406, %v416
    %v426 = vsel %vm423, %v408, %v418
    %v427 = vsel %vm423, %v410, %v420
    %v428 = vsel %vm423, %v412, %v422
    %v429 = vsel %vm423, %v414, %v404
    %v430 = vsel %vm423, %v416, %v406
    %v431 = vsel %vm423, %v418, %v408
    %v432 = vsel %vm423, %v420, %v410
    %v433 = vsel %vm423, %v422, %v412
    %434 = vrot.lane.b32.xlu0 %v25, 127
    %v435 = vpop.permute.xlu0 %434
    %436 = vrot.lane.b32.xlu0 %v27, 127
    %v437 = vpop.permute.xlu0 %436
    %438 = vrot.lane.b32.xlu0 %v29, 127
    %v439 = vpop.permute.xlu0 %438
    %440 = vrot.lane.b32.xlu0 %v31, 127
    %v441 = vpop.permute.xlu0 %440
    %442 = vrot.lane.b32.xlu0 %v33, 127
    %v443 = vpop.permute.xlu0 %442
    %444 = vrot.lane.b32.xlu0 %v26, 127
    %v445 = vpop.permute.xlu0 %444
    %446 = vrot.lane.b32.xlu0 %v28, 127
    %v447 = vpop.permute.xlu0 %446
    %448 = vrot.lane.b32.xlu0 %v30, 127
    %v449 = vpop.permute.xlu0 %448
    %450 = vrot.lane.b32.xlu0 %v32, 127
    %v451 = vpop.permute.xlu0 %450
    %452 = vrot.lane.b32.xlu0 %v34, 127
    %v453 = vpop.permute.xlu0 %452
    %vm454 = vcmp.lt.s32.totalorder %v239, 127
    %v455 = vsel %vm454, %v435, %v445
    %v456 = vsel %vm454, %v437, %v447
    %v457 = vsel %vm454, %v439, %v449
    %v458 = vsel %vm454, %v441, %v451
    %v459 = vsel %vm454, %v443, %v453
    %v460 = vsel %vm454, %v445, %v435
    %v461 = vsel %vm454, %v447, %v437
    %v462 = vsel %vm454, %v449, %v439
    %v463 = vsel %vm454, %v451, %v441
    %v464 = vsel %vm454, %v453, %v443
    %v465 = vsel %vm267, %v429, %v455
    %v466 = vsel %vm268, %v424, %v460
    %v467 = vsel %vm267, %v430, %v456
    %v468 = vsel %vm268, %v425, %v461
    %v469 = vsel %vm267, %v431, %v457
    %v470 = vsel %vm268, %v426, %v462
    %v471 = vsel %vm267, %v432, %v458
    %v472 = vsel %vm268, %v427, %v463
    %v473 = vsel %vm267, %v433, %v459
    %v474 = vsel %vm268, %v428, %v464
    %v475 = vsel %vm233, %v295, %v25
    %v476 = vsel %vm233, %v290, %v26
    %v477 = vsel %vm234, %v296, %v27
    %v478 = vsel %vm234, %v291, %v28
    %v479 = vsel %vm235, %v297, %v29
    %v480 = vsel %vm235, %v292, %v30
    %v481 = vsel %vm236, %v298, %v31
    %v482 = vsel %vm236, %v293, %v32
    %v483 = vsel %vm237, %v299, %v33
    %v484 = vsel %vm237, %v294, %v34
    %v485 = vsel %vm228, %v321, %v475
    %v486 = vsel %vm228, %v326, %v476
    %v487 = vsel %vm229, %v322, %v477
    %v488 = vsel %vm229, %v327, %v478
    %v489 = vsel %vm230, %v323, %v479
    %v490 = vsel %vm230, %v328, %v480
    %v491 = vsel %vm231, %v324, %v481
    %v492 = vsel %vm231, %v329, %v482
    %v493 = vsel %vm232, %v325, %v483
    %v494 = vsel %vm232, %v330, %v484
    %v495 = vsel %vm223, %v393, %v485
    %v496 = vsel %vm223, %v394, %v486
    %v497 = vsel %vm224, %v395, %v487
    %v498 = vsel %vm224, %v396, %v488
    %v499 = vsel %vm225, %v397, %v489
    %v500 = vsel %vm225, %v398, %v490
    %v501 = vsel %vm226, %v399, %v491
    %v502 = vsel %vm226, %v400, %v492
    %v503 = vsel %vm227, %v401, %v493
    %v504 = vsel %vm227, %v402, %v494
    %v505 = vsel %vm218, %v465, %v495
    %v506 = vsel %vm218, %v466, %v496
    %v507 = vsel %vm219, %v467, %v497
    %v508 = vsel %vm219, %v468, %v498
    %v509 = vsel %vm220, %v469, %v499
    %v510 = vsel %vm220, %v470, %v500
    %v511 = vsel %vm221, %v471, %v501
    %v512 = vsel %vm221, %v472, %v502
    %v513 = vsel %vm222, %v473, %v503
    %v514 = vsel %vm222, %v474, %v504
    %v515 = vmul.f32 %v505, 0.5
    %v516 = vmul.f32 %v506, 0.5
    %v517 = vmul.f32 %v507, 0.5
    %v518 = vmul.f32 %v508, 0.5
    %v519 = vmul.f32 %v509, 0.5
    %v520 = vmul.f32 %v510, 0.5
    %v521 = vmul.f32 %v511, 0.5
    %v522 = vmul.f32 %v512, 0.5
    %v523 = vmul.f32 %v513, 0.5
    %v524 = vmul.f32 %v514, 0.5
    %v525 = vtanh.pop %v515
    %v526 = vtanh.pop %v516
    %v527 = vtanh.pop %v517
    %v528 = vtanh.pop %v518
    %v529 = vtanh.pop %v519
    %v530 = vtanh.pop %v520
    %v531 = vtanh.pop %v521
    %v532 = vtanh.pop %v522
    %v533 = vtanh.pop %v523
    %v534 = vtanh.pop %v524
    %v535 = vmul.f32 %v525, 0.5
    %v536 = vmul.f32 %v526, 0.5
    %v537 = vmul.f32 %v527, 0.5
    %v538 = vmul.f32 %v528, 0.5
    %v539 = vmul.f32 %v529, 0.5
    %v540 = vmul.f32 %v530, 0.5
    %v541 = vmul.f32 %v531, 0.5
    %v542 = vmul.f32 %v532, 0.5
    %v543 = vmul.f32 %v533, 0.5
    %v544 = vmul.f32 %v534, 0.5
    %v545 = vadd.f32 %v535, 0.5
    %v546 = vadd.f32 %v536, 0.5
    %v547 = vadd.f32 %v537, 0.5
    %v548 = vadd.f32 %v538, 0.5
    %v549 = vadd.f32 %v539, 0.5
    %v550 = vadd.f32 %v540, 0.5
    %v551 = vadd.f32 %v541, 0.5
    %v552 = vadd.f32 %v542, 0.5
    %v553 = vadd.f32 %v543, 0.5
    %v554 = vadd.f32 %v544, 0.5
    %v555 = vmul.f32 %v505, %v545
    %v556 = vmul.f32 %v506, %v546
    %v557 = vmul.f32 %v507, %v547
    %v558 = vmul.f32 %v508, %v548
    %v559 = vmul.f32 %v509, %v549
    %v560 = vmul.f32 %v510, %v550
    %v561 = vmul.f32 %v511, %v551
    %v562 = vmul.f32 %v512, %v552
    %v563 = vmul.f32 %v513, %v553
    %v564 = vmul.f32 %v514, %v554
    %v565 = vmul.f32 %v555, 0.5
    %v566 = vmul.f32 %v556, 0.5
    %v567 = vmul.f32 %v557, 0.5
    %v568 = vmul.f32 %v558, 0.5
    %v569 = vmul.f32 %v559, 0.5
    %v570 = vmul.f32 %v560, 0.5
    %v571 = vmul.f32 %v561, 0.5
    %v572 = vmul.f32 %v562, 0.5
    %v573 = vmul.f32 %v563, 0.5
    %v574 = vmul.f32 %v564, 0.5
    %v575 = vtanh.pop %v565
    %v576 = vtanh.pop %v566
    %v577 = vtanh.pop %v567
    %v578 = vtanh.pop %v568
    %v579 = vtanh.pop %v569
    %v580 = vtanh.pop %v570
    %v581 = vtanh.pop %v571
    %v582 = vtanh.pop %v572
    %v583 = vtanh.pop %v573
    %v584 = vtanh.pop %v574
    %v585 = vmul.f32 %v575, 0.5
    %v586 = vmul.f32 %v576, 0.5
    %v587 = vmul.f32 %v577, 0.5
    %v588 = vmul.f32 %v578, 0.5
    %v589 = vmul.f32 %v579, 0.5
    %v590 = vmul.f32 %v580, 0.5
    %v591 = vmul.f32 %v581, 0.5
    %v592 = vmul.f32 %v582, 0.5
    %v593 = vmul.f32 %v583, 0.5
    %v594 = vmul.f32 %v584, 0.5
    %595 = vrot.lane.b32.xlu0 %v585, 16
    %v596 = vpop.permute.xlu0 %595
    %597 = vrot.lane.b32.xlu0 %v587, 16
    %v598 = vpop.permute.xlu0 %597
    %599 = vrot.lane.b32.xlu0 %v589, 16
    %v600 = vpop.permute.xlu0 %599
    %601 = vrot.lane.b32.xlu0 %v591, 16
    %v602 = vpop.permute.xlu0 %601
    %603 = vrot.lane.b32.xlu0 %v593, 16
    %v604 = vpop.permute.xlu0 %603
    %605 = vrot.lane.b32.xlu0 %v586, 16
    %v606 = vpop.permute.xlu0 %605
    %607 = vrot.lane.b32.xlu0 %v588, 16
    %v608 = vpop.permute.xlu0 %607
    %609 = vrot.lane.b32.xlu0 %v590, 16
    %v610 = vpop.permute.xlu0 %609
    %611 = vrot.lane.b32.xlu0 %v592, 16
    %v612 = vpop.permute.xlu0 %611
    %613 = vrot.lane.b32.xlu0 %v594, 16
    %v614 = vpop.permute.xlu0 %613
    %v615 = vsel %vm289, %v596, %v606
    %v616 = vsel %vm289, %v598, %v608
    %v617 = vsel %vm289, %v600, %v610
    %v618 = vsel %vm289, %v602, %v612
    %v619 = vsel %vm289, %v604, %v614
    %v620 = vsel %vm289, %v606, %v596
    %v621 = vsel %vm289, %v608, %v598
    %v622 = vsel %vm289, %v610, %v600
    %v623 = vsel %vm289, %v612, %v602
    %v624 = vsel %vm289, %v614, %v604
    %625 = vrot.lane.b32.xlu0 %v585, 112
    %v626 = vpop.permute.xlu0 %625
    %627 = vrot.lane.b32.xlu0 %v587, 112
    %v628 = vpop.permute.xlu0 %627
    %629 = vrot.lane.b32.xlu0 %v589, 112
    %v630 = vpop.permute.xlu0 %629
    %631 = vrot.lane.b32.xlu0 %v591, 112
    %v632 = vpop.permute.xlu0 %631
    %633 = vrot.lane.b32.xlu0 %v593, 112
    %v634 = vpop.permute.xlu0 %633
    %635 = vrot.lane.b32.xlu0 %v586, 112
    %v636 = vpop.permute.xlu0 %635
    %637 = vrot.lane.b32.xlu0 %v588, 112
    %v638 = vpop.permute.xlu0 %637
    %639 = vrot.lane.b32.xlu0 %v590, 112
    %v640 = vpop.permute.xlu0 %639
    %641 = vrot.lane.b32.xlu0 %v592, 112
    %v642 = vpop.permute.xlu0 %641
    %643 = vrot.lane.b32.xlu0 %v594, 112
    %v644 = vpop.permute.xlu0 %643
    %v645 = vsel %vm320, %v626, %v636
    %v646 = vsel %vm320, %v628, %v638
    %v647 = vsel %vm320, %v630, %v640
    %v648 = vsel %vm320, %v632, %v642
    %v649 = vsel %vm320, %v634, %v644
    %v650 = vsel %vm320, %v636, %v626
    %v651 = vsel %vm320, %v638, %v628
    %v652 = vsel %vm320, %v640, %v630
    %v653 = vsel %vm320, %v642, %v632
    %v654 = vsel %vm320, %v644, %v634
    %655 = vrot.lane.b32.xlu0 %v585, 113
    %v656 = vpop.permute.xlu0 %655
    %657 = vrot.lane.b32.xlu0 %v587, 113
    %v658 = vpop.permute.xlu0 %657
    %659 = vrot.lane.b32.xlu0 %v589, 113
    %v660 = vpop.permute.xlu0 %659
    %661 = vrot.lane.b32.xlu0 %v591, 113
    %v662 = vpop.permute.xlu0 %661
    %663 = vrot.lane.b32.xlu0 %v593, 113
    %v664 = vpop.permute.xlu0 %663
    %665 = vrot.lane.b32.xlu0 %v586, 113
    %v666 = vpop.permute.xlu0 %665
    %667 = vrot.lane.b32.xlu0 %v588, 113
    %v668 = vpop.permute.xlu0 %667
    %669 = vrot.lane.b32.xlu0 %v590, 113
    %v670 = vpop.permute.xlu0 %669
    %671 = vrot.lane.b32.xlu0 %v592, 113
    %v672 = vpop.permute.xlu0 %671
    %673 = vrot.lane.b32.xlu0 %v594, 113
    %v674 = vpop.permute.xlu0 %673
    %v675 = vsel %vm351, %v656, %v666
    %v676 = vsel %vm351, %v658, %v668
    %v677 = vsel %vm351, %v660, %v670
    %v678 = vsel %vm351, %v662, %v672
    %v679 = vsel %vm351, %v664, %v674
    %v680 = vsel %vm351, %v666, %v656
    %v681 = vsel %vm351, %v668, %v658
    %v682 = vsel %vm351, %v670, %v660
    %v683 = vsel %vm351, %v672, %v662
    %v684 = vsel %vm351, %v674, %v664
    %685 = vrot.lane.b32.xlu0 %v585, 1
    %v686 = vpop.permute.xlu0 %685
    %687 = vrot.lane.b32.xlu0 %v587, 1
    %v688 = vpop.permute.xlu0 %687
    %689 = vrot.lane.b32.xlu0 %v589, 1
    %v690 = vpop.permute.xlu0 %689
    %691 = vrot.lane.b32.xlu0 %v591, 1
    %v692 = vpop.permute.xlu0 %691
    %693 = vrot.lane.b32.xlu0 %v593, 1
    %v694 = vpop.permute.xlu0 %693
    %695 = vrot.lane.b32.xlu0 %v586, 1
    %v696 = vpop.permute.xlu0 %695
    %697 = vrot.lane.b32.xlu0 %v588, 1
    %v698 = vpop.permute.xlu0 %697
    %699 = vrot.lane.b32.xlu0 %v590, 1
    %v700 = vpop.permute.xlu0 %699
    %701 = vrot.lane.b32.xlu0 %v592, 1
    %v702 = vpop.permute.xlu0 %701
    %703 = vrot.lane.b32.xlu0 %v594, 1
    %v704 = vpop.permute.xlu0 %703
    %v705 = vsel %vm382, %v686, %v696
    %v706 = vsel %vm382, %v688, %v698
    %v707 = vsel %vm382, %v690, %v700
    %v708 = vsel %vm382, %v692, %v702
    %v709 = vsel %vm382, %v694, %v704
    %v710 = vsel %vm382, %v696, %v686
    %v711 = vsel %vm382, %v698, %v688
    %v712 = vsel %vm382, %v700, %v690
    %v713 = vsel %vm382, %v702, %v692
    %v714 = vsel %vm382, %v704, %v694
    %v715 = vsel %vm265, %v675, %v710
    %v716 = vsel %vm266, %v680, %v705
    %v717 = vsel %vm265, %v676, %v711
    %v718 = vsel %vm266, %v681, %v706
    %v719 = vsel %vm265, %v677, %v712
    %v720 = vsel %vm266, %v682, %v707
    %v721 = vsel %vm265, %v678, %v713
    %v722 = vsel %vm266, %v683, %v708
    %v723 = vsel %vm265, %v679, %v714
    %v724 = vsel %vm266, %v684, %v709
    %725 = vrot.lane.b32.xlu0 %v585, 15
    %v726 = vpop.permute.xlu0 %725
    %727 = vrot.lane.b32.xlu0 %v587, 15
    %v728 = vpop.permute.xlu0 %727
    %729 = vrot.lane.b32.xlu0 %v589, 15
    %v730 = vpop.permute.xlu0 %729
    %731 = vrot.lane.b32.xlu0 %v591, 15
    %v732 = vpop.permute.xlu0 %731
    %733 = vrot.lane.b32.xlu0 %v593, 15
    %v734 = vpop.permute.xlu0 %733
    %735 = vrot.lane.b32.xlu0 %v586, 15
    %v736 = vpop.permute.xlu0 %735
    %737 = vrot.lane.b32.xlu0 %v588, 15
    %v738 = vpop.permute.xlu0 %737
    %739 = vrot.lane.b32.xlu0 %v590, 15
    %v740 = vpop.permute.xlu0 %739
    %741 = vrot.lane.b32.xlu0 %v592, 15
    %v742 = vpop.permute.xlu0 %741
    %743 = vrot.lane.b32.xlu0 %v594, 15
    %v744 = vpop.permute.xlu0 %743
    %v745 = vsel %vm423, %v726, %v736
    %v746 = vsel %vm423, %v728, %v738
    %v747 = vsel %vm423, %v730, %v740
    %v748 = vsel %vm423, %v732, %v742
    %v749 = vsel %vm423, %v734, %v744
    %v750 = vsel %vm423, %v736, %v726
    %v751 = vsel %vm423, %v738, %v728
    %v752 = vsel %vm423, %v740, %v730
    %v753 = vsel %vm423, %v742, %v732
    %v754 = vsel %vm423, %v744, %v734
    %755 = vrot.lane.b32.xlu0 %v585, 127
    %v756 = vpop.permute.xlu0 %755
    %757 = vrot.lane.b32.xlu0 %v587, 127
    %v758 = vpop.permute.xlu0 %757
    %759 = vrot.lane.b32.xlu0 %v589, 127
    %v760 = vpop.permute.xlu0 %759
    %761 = vrot.lane.b32.xlu0 %v591, 127
    %v762 = vpop.permute.xlu0 %761
    %763 = vrot.lane.b32.xlu0 %v593, 127
    %v764 = vpop.permute.xlu0 %763
    %765 = vrot.lane.b32.xlu0 %v586, 127
    %v766 = vpop.permute.xlu0 %765
    %767 = vrot.lane.b32.xlu0 %v588, 127
    %v768 = vpop.permute.xlu0 %767
    %769 = vrot.lane.b32.xlu0 %v590, 127
    %v770 = vpop.permute.xlu0 %769
    %771 = vrot.lane.b32.xlu0 %v592, 127
    %v772 = vpop.permute.xlu0 %771
    %773 = vrot.lane.b32.xlu0 %v594, 127
    %v774 = vpop.permute.xlu0 %773
    %v775 = vsel %vm454, %v756, %v766
    %v776 = vsel %vm454, %v758, %v768
    %v777 = vsel %vm454, %v760, %v770
    %v778 = vsel %vm454, %v762, %v772
    %v779 = vsel %vm454, %v764, %v774
    %v780 = vsel %vm454, %v766, %v756
    %v781 = vsel %vm454, %v768, %v758
    %v782 = vsel %vm454, %v770, %v760
    %v783 = vsel %vm454, %v772, %v762
    %v784 = vsel %vm454, %v774, %v764
    %v785 = vsel %vm267, %v750, %v775
    %v786 = vsel %vm268, %v745, %v780
    %v787 = vsel %vm267, %v751, %v776
    %v788 = vsel %vm268, %v746, %v781
    %v789 = vsel %vm267, %v752, %v777
    %v790 = vsel %vm268, %v747, %v782
    %v791 = vsel %vm267, %v753, %v778
    %v792 = vsel %vm268, %v748, %v783
    %v793 = vsel %vm267, %v754, %v779
    %v794 = vsel %vm268, %v749, %v784
    %v795 = vsel %vm233, %v620, %v585
    %v796 = vsel %vm233, %v615, %v586
    %v797 = vsel %vm234, %v621, %v587
    %v798 = vsel %vm234, %v616, %v588
    %v799 = vsel %vm235, %v622, %v589
    %v800 = vsel %vm235, %v617, %v590
    %v801 = vsel %vm236, %v623, %v591
    %v802 = vsel %vm236, %v618, %v592
    %v803 = vsel %vm237, %v624, %v593
    %v804 = vsel %vm237, %v619, %v594
    %v805 = vsel %vm228, %v645, %v795
    %v806 = vsel %vm228, %v650, %v796
    %v807 = vsel %vm229, %v646, %v797
    %v808 = vsel %vm229, %v651, %v798
    %v809 = vsel %vm230, %v647, %v799
    %v810 = vsel %vm230, %v652, %v800
    %v811 = vsel %vm231, %v648, %v801
    %v812 = vsel %vm231, %v653, %v802
    %v813 = vsel %vm232, %v649, %v803
    %v814 = vsel %vm232, %v654, %v804
    %v815 = vsel %vm223, %v715, %v805
    %v816 = vsel %vm223, %v716, %v806
    %v817 = vsel %vm224, %v717, %v807
    %v818 = vsel %vm224, %v718, %v808
    %v819 = vsel %vm225, %v719, %v809
    %v820 = vsel %vm225, %v720, %v810
    %v821 = vsel %vm226, %v721, %v811
    %v822 = vsel %vm226, %v722, %v812
    %v823 = vsel %vm227, %v723, %v813
    %v824 = vsel %vm227, %v724, %v814
    %v825 = vsel %vm218, %v785, %v815
    %v826 = vsel %vm218, %v786, %v816
    %v827 = vsel %vm219, %v787, %v817
    %v828 = vsel %vm219, %v788, %v818
    %v829 = vsel %vm220, %v789, %v819
    %v830 = vsel %vm220, %v790, %v820
    %v831 = vsel %vm221, %v791, %v821
    %v832 = vsel %vm221, %v792, %v822
    %v833 = vsel %vm222, %v793, %v823
    %v834 = vsel %vm222, %v794, %v824
    %v835 = vadd.f32 %v555, %v25
    %v836 = vadd.f32 %v556, %v26
    %v837 = vadd.f32 %v557, %v27
    %v838 = vadd.f32 %v558, %v28
    %v839 = vadd.f32 %v559, %v29
    %v840 = vadd.f32 %v560, %v30
    %v841 = vadd.f32 %v561, %v31
    %v842 = vadd.f32 %v562, %v32
    %v843 = vadd.f32 %v563, %v33
    %v844 = vadd.f32 %v564, %v34
    %v845 = vmul.f32 %v835, %v825
    %v846 = vmul.f32 %v836, %v826
    %v847 = vmul.f32 %v837, %v827
    %v848 = vmul.f32 %v838, %v828
    %v849 = vmul.f32 %v839, %v829
    %v850 = vmul.f32 %v840, %v830
    %v851 = vmul.f32 %v841, %v831
    %v852 = vmul.f32 %v842, %v832
    %v853 = vmul.f32 %v843, %v833
    %v854 = vmul.f32 %v844, %v834
    %855 = vst [vmem:[#allocation5] sm:$0xff] %v845
    %856 = vst [vmem:[#allocation5 + $0x8] sm:$0xff] %v846
    %857 = vst [vmem:[#allocation5 + $0x10] sm:$0xff] %v847
    %858 = vst [vmem:[#allocation5 + $0x18] sm:$0xff] %v848
    %859 = vst [vmem:[#allocation5 + $0x20] sm:$0xff] %v849
    %860 = vst [vmem:[#allocation5 + $0x28] sm:$0xff] %v850
    %861 = vst [vmem:[#allocation5 + $0x30] sm:$0xff] %v851
    %862 = vst [vmem:[#allocation5 + $0x38] sm:$0xff] %v852
    %863 = vst [vmem:[#allocation5 + $0x40] sm:$0xff] %v853
    %864 = vst [vmem:[#allocation5 + $0x48] sm:$0xff] %v854
    // Predicated region
    $region10: #{tpu_custom_call.1} parent=1 // pred_check
      _
    $region11: #{tpu_custom_call.1} parent=1 // pred_check_branch
      %866 = sbr.rel (0) target = $region13
    $region12: #{tpu_custom_call.1} parent=1 // pred_region
      %868 = vsyncadd [#allocation4], 0
      %s869 = sshll.u32 [#allocation5], 4
      %s870 = int_to_ptr.vmem [resolvable:$true] %s869
      %s871 = sshll.u32 %s1, 4
      %s872 = int_to_ptr.hbm [resolvable:$true] %s871
      %877 = dma.vmem_to_hbm [thread:$0]  %s870, 1280, %s872, [#allocation4], 256, 256, 16
    $region13: #{tpu_custom_call.1} parent=1 // pred_fallthru
      _
    // Predicated region
    $region14: #{tpu_custom_call.1} parent=1 // pred_check
      _
    $region15: #{tpu_custom_call.1} parent=1 // pred_check_branch
      %879 = sbr.rel (0) target = $region17
    $region16: #{tpu_custom_call.1} parent=1 // pred_region
      %881 = dma.done [#allocation4], 1280
    $region17: #{tpu_custom_call.1} parent=1 // pred_fallthru
      _
    %882 = vsyncpa [#allocation3], 1
    %883 = vsyncpa [#allocation4], 1

</llo_original>
